<compile_context>
chip_gen: v7x
topology: tpu7x:2x2x1
jax: 0.10.0
libtpu: 0.0.40
codegen_flags: <defaults>
</compile_context>

<pallas_src>
import functools

import jax
import jax.numpy as jnp
import numpy as np
from jax import lax
from jax.experimental import pallas as pl
from jax.experimental.pallas import tpu as pltpu


def _resblock_kernel(xw_ref, w1_ref, s1_ref, b1_ref, w2_ref, s2_ref, b2_ref,
                     ws_ref, ss_ref, bs_ref, o_ref, *, tl, l_out, has_proj):
    t = pl.program_id(1)
    tle = tl + 2
    c_in = xw_ref.shape[0] // 3

    xw = xw_ref[...]                                     # (3*Cin, TL+2) bf16

    # ---- conv1: 3 taps flattened into ONE contraction; f32 accumulate -------
    acc1 = jnp.dot(w1_ref[...], xw, preferred_element_type=jnp.float32)   # (Cout, TL+2)
    # folded BN1 + ReLU (Dropout = identity in eval)
    a = jnp.maximum(acc1 * s1_ref[...] + b1_ref[...], 0.0)

    # zero the halo columns: they stand in for conv2's zero padding (pe = -1)
    # and for positions at/after the true sequence end (pe >= L_out, incl. the
    # lane padding of the last tile).
    pe = t * tl - 1 + lax.broadcasted_iota(jnp.int32, (1, tle), 1)
    a = jnp.where((pe >= 0) & (pe < l_out), a, 0.0)

    # ---- conv2 (stride 1): stack the 3 shifted views -> one matmul ----------
    a_bf = a.astype(jnp.bfloat16)
    a3 = jnp.concatenate(
        [a_bf[:, 0:tl], a_bf[:, 1:tl + 1], a_bf[:, 2:tl + 2]], axis=0)    # (3*Cout, TL)
    acc2 = jnp.dot(w2_ref[...], a3, preferred_element_type=jnp.float32)   # (Cout, TL)
    left = jnp.maximum(acc2 * s2_ref[...] + b2_ref[...], 0.0)

    # ---- shortcut: tap k=1 of the slab is exactly x[:, stride*p] -------------
    xs = xw[c_in:2 * c_in, 1:tl + 1]                     # (Cin, TL)
    if has_proj:
        sc = jnp.dot(ws_ref[...], xs, preferred_element_type=jnp.float32)
        sc = sc * ss_ref[...] + bs_ref[...]
    else:
        sc = xs.astype(jnp.float32)

    o_ref[...] = jnp.maximum(left + sc, 0.0)


def _fold_bn(bn, eps):
    gamma, beta, mean, var = bn
    s = (gamma / jnp.sqrt(var + eps)).astype(jnp.float32)
    b = (beta - mean * s).astype(jnp.float32)
    return s.reshape(-1, 1), b.reshape(-1, 1)            # per-Cout row scale/bias


def _rep_spec(shape):
    nd = len(shape)
    return pl.BlockSpec(shape, lambda nb, tb, _nd=nd: (0,) * _nd)


def resblock_forward(x_ncl, params, stride, eps=1e-5):
    """x_ncl: (N, Cin, L) float32, PyTorch Conv1d layout. Returns (N, Cout, L_out) f32."""
    n, c_in, l = x_ncl.shape
    c_out = params['w1'].shape[0]
    s = stride
    l_out = (l + 2 - 3) // s + 1

    has_proj = params.get('ws') is not None
    if not has_proj:
        assert s == 1 and c_in == c_out, \
            "identity shortcut requires stride == 1 and Cin == Cout"

    # L_out tiling: lane-dense multiple of 128, capped for VMEM headroom (v7x: 64 MiB).
    tl = min(512, pl.cdiv(l_out, 128) * 128)
    num_tiles = pl.cdiv(l_out, tl)
    l_out_pad = num_tiles * tl
    tle = tl + 2
    l_ext = l_out_pad + 2

    # ---- wrapper: build per-(tile, tap) dense windows -> (N, T, 3*Cin, TL+2) ----
    # Tap k at extended output position pe reads x[s*pe + k - 1]; each tile covers
    # pe in [t*TL - 1, t*TL + TL] (the +/-1 halo lets conv2 be computed locally).
    pad_l = s + 1
    lp_needed = s * (l_out_pad + 1) + 3
    pad_r = lp_needed - (pad_l + l)
    xp = jnp.pad(x_ncl.astype(jnp.float32), ((0, 0), (0, 0), (pad_l, pad_r)))
    taps = []
    for k in range(3):
        xk = lax.slice_in_dim(xp, k, k + s * (l_ext - 1) + 1, stride=s, axis=2)  # (N,Cin,l_ext)
        wins = [lax.slice_in_dim(xk, t * tl, t * tl + tle, axis=2)
                for t in range(num_tiles)]
        taps.append(jnp.stack(wins, axis=1))                                     # (N,T,Cin,TL+2)
    xw = jnp.concatenate(taps, axis=2).astype(jnp.bfloat16)                      # (N,T,3Cin,TL+2)

    # ---- fold conv weights (taps flattened) and BN (eval running stats) --------
    w1f = jnp.transpose(params['w1'], (0, 2, 1)).reshape(c_out, 3 * c_in).astype(jnp.bfloat16)
    w2f = jnp.transpose(params['w2'], (0, 2, 1)).reshape(c_out, 3 * c_out).astype(jnp.bfloat16)
    s1, b1 = _fold_bn(params['bn1'], eps)
    s2, b2 = _fold_bn(params['bn2'], eps)
    if has_proj:
        wsf = params['ws'][:, :, 0].astype(jnp.bfloat16)                         # (Cout, Cin)
        ss, bs = _fold_bn(params['bns'], eps)
    else:
        wsf = jnp.zeros((c_out, c_in), jnp.bfloat16)                             # unused
        ss = jnp.ones((c_out, 1), jnp.float32)
        bs = jnp.zeros((c_out, 1), jnp.float32)

    kernel = functools.partial(_resblock_kernel, tl=tl, l_out=l_out, has_proj=has_proj)

    flops = 2 * n * l_out_pad * c_out * (3 * c_in + 3 * c_out + c_in)
    bytes_accessed = int(xw.size * 2 + n * c_out * l_out_pad * 4
                         + (w1f.size + w2f.size + wsf.size) * 2 + 6 * c_out * 4)

    out = pl.pallas_call(
        kernel,
        out_shape=jax.ShapeDtypeStruct((n, c_out, l_out_pad), jnp.float32),
        grid=(n, num_tiles),
        in_specs=[
            pl.BlockSpec((None, None, 3 * c_in, tle), lambda nb, tb: (nb, tb, 0, 0)),
            _rep_spec(w1f.shape), _rep_spec(s1.shape), _rep_spec(b1.shape),
            _rep_spec(w2f.shape), _rep_spec(s2.shape), _rep_spec(b2.shape),
            _rep_spec(wsf.shape), _rep_spec(ss.shape), _rep_spec(bs.shape),
        ],
        out_specs=pl.BlockSpec((None, c_out, tl), lambda nb, tb: (nb, 0, tb)),
        compiler_params=pltpu.CompilerParams(
            dimension_semantics=("parallel", "parallel")),
        cost_estimate=pl.CostEstimate(flops=flops, transcendentals=0,
                                      bytes_accessed=bytes_accessed),
    )(xw, w1f, s1, b1, w2f, s2, b2, wsf, ss, bs)

    return out[:, :, :l_out]


# -------- pure-JAX reference: eval-mode PyTorch semantics with the same
# -------- bf16-operand / f32-accumulate mixed precision the kernel uses ------
def _ref_forward(x_ncl, params, stride, eps=1e-5):
    q = lambda a: a.astype(jnp.bfloat16).astype(jnp.float32)

    def conv1d(xx, w, st, pad):
        return lax.conv_general_dilated(xx, w, window_strides=(st,),
                                        padding=[(pad, pad)],
                                        dimension_numbers=('NCH', 'OIH', 'NCH'))

    def bn(xx, pp):
        gamma, beta, mean, var = pp
        return ((xx - mean[None, :, None]) / jnp.sqrt(var[None, :, None] + eps)
                * gamma[None, :, None] + beta[None, :, None])

    y = jax.nn.relu(bn(conv1d(q(x_ncl), q(params['w1']), stride, 1), params['bn1']))
    y = jax.nn.relu(bn(conv1d(q(y), q(params['w2']), 1, 1), params['bn2']))
    if params.get('ws') is not None:
        sc = bn(conv1d(q(x_ncl), q(params['ws']), stride, 0), params['bns'])
    else:
        sc = q(x_ncl)   # kernel takes the residual from the bf16 activation copy
    return jax.nn.relu(y + sc)


def _bn_params(key, c):
    k0, k1, k2, k3 = jax.random.split(key, 4)
    gamma = jax.random.uniform(k0, (c,), jnp.float32, 0.5, 1.5)
    beta = 0.1 * jax.random.normal(k1, (c,), jnp.float32)
    mean = 0.1 * jax.random.normal(k2, (c,), jnp.float32)
    var = jax.random.uniform(k3, (c,), jnp.float32, 0.5, 1.5)
    return (gamma, beta, mean, var)


def _make_params(key, c_in, c_out, with_proj):
    ks = jax.random.split(key, 6)
    return {
        'w1': 0.2 * jax.random.normal(ks[0], (c_out, c_in, 3), jnp.float32),
        'bn1': _bn_params(ks[1], c_out),
        'w2': 0.2 * jax.random.normal(ks[2], (c_out, c_out, 3), jnp.float32),
        'bn2': _bn_params(ks[3], c_out),
        'ws': (0.2 * jax.random.normal(ks[4], (c_out, c_in, 1), jnp.float32)
               if with_proj else None),
        'bns': _bn_params(ks[5], c_out) if with_proj else None,
    }


if __name__ == "__main__":
    key = jax.random.PRNGKey(0)
    k_p1, k_p2, k_x1, k_x2 = jax.random.split(key, 4)

    # case 1: projection shortcut (stride=2, Cin != Cout)
    N, C_IN, C_OUT, L, STRIDE = 2, 4, 8, 16, 2
    params1 = _make_params(k_p1, C_IN, C_OUT, with_proj=True)
    x1 = jax.random.normal(k_x1, (N, C_IN, L), jnp.float32)
    out1 = jax.block_until_ready(resblock_forward(x1, params1, STRIDE))
    ref1 = jax.block_until_ready(_ref_forward(x1, params1, STRIDE))
    np.testing.assert_allclose(np.asarray(out1), np.asarray(ref1), rtol=2e-3, atol=2e-3)

    # case 2: identity shortcut (stride=1, Cin == Cout)
    params2 = _make_params(k_p2, C_OUT, C_OUT, with_proj=False)
    x2 = jax.random.normal(k_x2, (N, C_OUT, L), jnp.float32)
    out2 = jax.block_until_ready(resblock_forward(x2, params2, 1))
    ref2 = jax.block_until_ready(_ref_forward(x2, params2, 1))
    np.testing.assert_allclose(np.asarray(out2), np.asarray(ref2), rtol=2e-3, atol=2e-3)

    print("KERNEL_OK")
</pallas_src>

<mosaic_0001>
module attributes {stable_mosaic.version = 11 : i64} {
  func.func @_resblock_kernel(%arg0: i32, %arg1: i32, %arg2: memref<1x1x12x130xbf16, #tpu.memory_space<vmem>>, %arg3: memref<8x12xbf16, #tpu.memory_space<vmem>>, %arg4: memref<8x1xf32, #tpu.memory_space<vmem>>, %arg5: memref<8x1xf32, #tpu.memory_space<vmem>>, %arg6: memref<8x24xbf16, #tpu.memory_space<vmem>>, %arg7: memref<8x1xf32, #tpu.memory_space<vmem>>, %arg8: memref<8x1xf32, #tpu.memory_space<vmem>>, %arg9: memref<8x4xbf16, #tpu.memory_space<vmem>>, %arg10: memref<8x1xf32, #tpu.memory_space<vmem>>, %arg11: memref<8x1xf32, #tpu.memory_space<vmem>>, %arg12: memref<1x8x128xf32, #tpu.memory_space<vmem>>) attributes {dimension_semantics = [#tpu.dimension_semantics<parallel>, #tpu.dimension_semantics<parallel>], iteration_bounds = array<i64: 2, 1>, scalar_prefetch = 0 : i64, scratch_operands = 0 : i64, tpu.core_type = #tpu.core_type<tc>, window_params = [{transform_indices = @transform_0, window_bounds = array<i64: 1, 1, 12, 130>}, {pipeline_mode = #tpu.pipeline_mode<synchronous>, transform_indices = @transform_1, window_bounds = array<i64: 8, 12>}, {pipeline_mode = #tpu.pipeline_mode<synchronous>, transform_indices = @transform_2, window_bounds = array<i64: 8, 1>}, {pipeline_mode = #tpu.pipeline_mode<synchronous>, transform_indices = @transform_3, window_bounds = array<i64: 8, 1>}, {pipeline_mode = #tpu.pipeline_mode<synchronous>, transform_indices = @transform_4, window_bounds = array<i64: 8, 24>}, {pipeline_mode = #tpu.pipeline_mode<synchronous>, transform_indices = @transform_5, window_bounds = array<i64: 8, 1>}, {pipeline_mode = #tpu.pipeline_mode<synchronous>, transform_indices = @transform_6, window_bounds = array<i64: 8, 1>}, {pipeline_mode = #tpu.pipeline_mode<synchronous>, transform_indices = @transform_7, window_bounds = array<i64: 8, 4>}, {pipeline_mode = #tpu.pipeline_mode<synchronous>, transform_indices = @transform_8, window_bounds = array<i64: 8, 1>}, {pipeline_mode = #tpu.pipeline_mode<synchronous>, transform_indices = @transform_9, window_bounds = array<i64: 8, 1>}, {transform_indices = @transform_10, window_bounds = array<i64: 1, 8, 128>}]} {
    %c0 = arith.constant 0 : index
    %c0_0 = arith.constant 0 : index
    %c0_1 = arith.constant 0 : index
    %c0_2 = arith.constant 0 : index
    %0 = vector.load %arg2[%c0, %c0_0, %c0_1, %c0_2] : memref<1x1x12x130xbf16, #tpu.memory_space<vmem>>, vector<1x1x12x130xbf16>
    %1 = vector.shape_cast %0 : vector<1x1x12x130xbf16> to vector<12x130xbf16>
    %c0_3 = arith.constant 0 : index
    %c0_4 = arith.constant 0 : index
    %2 = vector.load %arg3[%c0_3, %c0_4] : memref<8x12xbf16, #tpu.memory_space<vmem>>, vector<8x12xbf16>
    %cst = arith.constant dense<0.000000e+00> : vector<8x130xf32>
    %3 = tpu.matmul %2, %1, %cst {dimension_numbers = #tpu.dot_dimension_numbers<[1], [0], [0], [1], [0, 0, 1, 1], [], []>} : vector<8x12xbf16>, vector<12x130xbf16>, vector<8x130xf32> -> vector<8x130xf32>
    %c0_5 = arith.constant 0 : index
    %c0_6 = arith.constant 0 : index
    %4 = vector.load %arg4[%c0_5, %c0_6] : memref<8x1xf32, #tpu.memory_space<vmem>>, vector<8x1xf32>
    %5 = vector.broadcast %4 : vector<8x1xf32> to vector<8x130xf32>
    %6 = arith.mulf %3, %5 : vector<8x130xf32>
    %c0_7 = arith.constant 0 : index
    %c0_8 = arith.constant 0 : index
    %7 = vector.load %arg5[%c0_7, %c0_8] : memref<8x1xf32, #tpu.memory_space<vmem>>, vector<8x1xf32>
    %8 = vector.broadcast %7 : vector<8x1xf32> to vector<8x130xf32>
    %9 = arith.addf %6, %8 : vector<8x130xf32>
    %cst_9 = arith.constant 0.000000e+00 : f32
    %10 = vector.broadcast %cst_9 : f32 to vector<8x130xf32>
    %11 = arith.maximumf %9, %10 : vector<8x130xf32>
    %c128_i32 = arith.constant 128 : i32
    %12 = arith.muli %arg1, %c128_i32 : i32
    %c1_i32 = arith.constant 1 : i32
    %13 = arith.subi %12, %c1_i32 : i32
    %14 = tpu.iota {dimensions = array<i32: 1>} : vector<1x130xi32>
    %15 = vector.broadcast %13 : i32 to vector<1x130xi32>
    %16 = arith.addi %15, %14 : vector<1x130xi32>
    %c0_i32 = arith.constant 0 : i32
    %17 = vector.broadcast %c0_i32 : i32 to vector<1x130xi32>
    %18 = arith.cmpi sge, %16, %17 : vector<1x130xi32>
    %c8_i32 = arith.constant 8 : i32
    %19 = vector.broadcast %c8_i32 : i32 to vector<1x130xi32>
    %20 = arith.cmpi slt, %16, %19 : vector<1x130xi32>
    %21 = arith.andi %18, %20 : vector<1x130xi1>
    %cst_10 = arith.constant 0.000000e+00 : f32
    %22 = vector.shape_cast %21 : vector<1x130xi1> to vector<1x130xi1>
    %23 = vector.broadcast %22 : vector<1x130xi1> to vector<8x130xi1>
    %24 = vector.broadcast %cst_10 : f32 to vector<8x130xf32>
    %25 = arith.select %23, %11, %24 : vector<8x130xi1>, vector<8x130xf32>
    %26 = arith.truncf %25 : vector<8x130xf32> to vector<8x130xbf16>
    %27 = vector.extract_strided_slice %26 {offsets = [0, 0], sizes = [8, 128], strides = [1, 1]} : vector<8x130xbf16> to vector<8x128xbf16>
    %28 = vector.extract_strided_slice %26 {offsets = [0, 1], sizes = [8, 128], strides = [1, 1]} : vector<8x130xbf16> to vector<8x128xbf16>
    %29 = vector.extract_strided_slice %26 {offsets = [0, 2], sizes = [8, 128], strides = [1, 1]} : vector<8x130xbf16> to vector<8x128xbf16>
    %30 = tpu.concatenate %27, %28, %29 in 0 : vector<8x128xbf16>, vector<8x128xbf16>, vector<8x128xbf16> -> vector<24x128xbf16>
    %c0_11 = arith.constant 0 : index
    %c0_12 = arith.constant 0 : index
    %31 = vector.load %arg6[%c0_11, %c0_12] : memref<8x24xbf16, #tpu.memory_space<vmem>>, vector<8x24xbf16>
    %cst_13 = arith.constant dense<0.000000e+00> : vector<8x128xf32>
    %32 = tpu.matmul %31, %30, %cst_13 {dimension_numbers = #tpu.dot_dimension_numbers<[1], [0], [0], [1], [0, 0, 1, 1], [], []>} : vector<8x24xbf16>, vector<24x128xbf16>, vector<8x128xf32> -> vector<8x128xf32>
    %c0_14 = arith.constant 0 : index
    %c0_15 = arith.constant 0 : index
    %33 = vector.load %arg7[%c0_14, %c0_15] : memref<8x1xf32, #tpu.memory_space<vmem>>, vector<8x1xf32>
    %34 = vector.broadcast %33 : vector<8x1xf32> to vector<8x128xf32>
    %35 = arith.mulf %32, %34 : vector<8x128xf32>
    %c0_16 = arith.constant 0 : index
    %c0_17 = arith.constant 0 : index
    %36 = vector.load %arg8[%c0_16, %c0_17] : memref<8x1xf32, #tpu.memory_space<vmem>>, vector<8x1xf32>
    %37 = vector.broadcast %36 : vector<8x1xf32> to vector<8x128xf32>
    %38 = arith.addf %35, %37 : vector<8x128xf32>
    %cst_18 = arith.constant 0.000000e+00 : f32
    %39 = vector.broadcast %cst_18 : f32 to vector<8x128xf32>
    %40 = arith.maximumf %38, %39 : vector<8x128xf32>
    %41 = vector.extract_strided_slice %1 {offsets = [4, 1], sizes = [4, 128], strides = [1, 1]} : vector<12x130xbf16> to vector<4x128xbf16>
    %c0_19 = arith.constant 0 : index
    %c0_20 = arith.constant 0 : index
    %42 = vector.load %arg9[%c0_19, %c0_20] : memref<8x4xbf16, #tpu.memory_space<vmem>>, vector<8x4xbf16>
    %cst_21 = arith.constant dense<0.000000e+00> : vector<8x128xf32>
    %43 = tpu.matmul %42, %41, %cst_21 {dimension_numbers = #tpu.dot_dimension_numbers<[1], [0], [0], [1], [0, 0, 1, 1], [], []>} : vector<8x4xbf16>, vector<4x128xbf16>, vector<8x128xf32> -> vector<8x128xf32>
    %c0_22 = arith.constant 0 : index
    %c0_23 = arith.constant 0 : index
    %44 = vector.load %arg10[%c0_22, %c0_23] : memref<8x1xf32, #tpu.memory_space<vmem>>, vector<8x1xf32>
    %45 = vector.broadcast %44 : vector<8x1xf32> to vector<8x128xf32>
    %46 = arith.mulf %43, %45 : vector<8x128xf32>
    %c0_24 = arith.constant 0 : index
    %c0_25 = arith.constant 0 : index
    %47 = vector.load %arg11[%c0_24, %c0_25] : memref<8x1xf32, #tpu.memory_space<vmem>>, vector<8x1xf32>
    %48 = vector.broadcast %47 : vector<8x1xf32> to vector<8x128xf32>
    %49 = arith.addf %46, %48 : vector<8x128xf32>
    %50 = arith.addf %40, %49 : vector<8x128xf32>
    %cst_26 = arith.constant 0.000000e+00 : f32
    %51 = vector.broadcast %cst_26 : f32 to vector<8x128xf32>
    %52 = arith.maximumf %50, %51 : vector<8x128xf32>
    %c0_27 = arith.constant 0 : index
    %c0_28 = arith.constant 0 : index
    %c0_29 = arith.constant 0 : index
    %53 = vector.load %arg12[%c0_27, %c0_28, %c0_29] : memref<1x8x128xf32, #tpu.memory_space<vmem>>, vector<1x8x128xf32>
    %54 = vector.shape_cast %53 : vector<1x8x128xf32> to vector<8x128xf32>
    %55 = vector.shape_cast %52 : vector<8x128xf32> to vector<1x8x128xf32>
    tpu.vector_store %arg12[%c0_27, %c0_28, %c0_29], %55 {strides = array<i32>} : memref<1x8x128xf32, #tpu.memory_space<vmem>>, vector<1x8x128xf32>,
    return
  }
  func.func @transform_0(%arg0: i32, %arg1: i32) -> (i32, i32, i32, i32) {
    %c0_i32 = arith.constant 0 : i32
    %c0_i32_0 = arith.constant 0 : i32
    %c0_i32_1 = arith.constant 0 : i32
    return %arg0, %arg1, %c0_i32, %c0_i32_0 : i32, i32, i32, i32
  }
  func.func @transform_1(%arg0: i32, %arg1: i32) -> (i32, i32) {
    %c0_i32 = arith.constant 0 : i32
    %c0_i32_0 = arith.constant 0 : i32
    %c0_i32_1 = arith.constant 0 : i32
    return %c0_i32, %c0_i32_0 : i32, i32
  }
  func.func @transform_2(%arg0: i32, %arg1: i32) -> (i32, i32) {
    %c0_i32 = arith.constant 0 : i32
    %c0_i32_0 = arith.constant 0 : i32
    %c0_i32_1 = arith.constant 0 : i32
    return %c0_i32, %c0_i32_0 : i32, i32
  }
  func.func @transform_3(%arg0: i32, %arg1: i32) -> (i32, i32) {
    %c0_i32 = arith.constant 0 : i32
    %c0_i32_0 = arith.constant 0 : i32
    %c0_i32_1 = arith.constant 0 : i32
    return %c0_i32, %c0_i32_0 : i32, i32
  }
  func.func @transform_4(%arg0: i32, %arg1: i32) -> (i32, i32) {
    %c0_i32 = arith.constant 0 : i32
    %c0_i32_0 = arith.constant 0 : i32
    %c0_i32_1 = arith.constant 0 : i32
    return %c0_i32, %c0_i32_0 : i32, i32
  }
  func.func @transform_5(%arg0: i32, %arg1: i32) -> (i32, i32) {
    %c0_i32 = arith.constant 0 : i32
    %c0_i32_0 = arith.constant 0 : i32
    %c0_i32_1 = arith.constant 0 : i32
    return %c0_i32, %c0_i32_0 : i32, i32
  }
  func.func @transform_6(%arg0: i32, %arg1: i32) -> (i32, i32) {
    %c0_i32 = arith.constant 0 : i32
    %c0_i32_0 = arith.constant 0 : i32
    %c0_i32_1 = arith.constant 0 : i32
    return %c0_i32, %c0_i32_0 : i32, i32
  }
  func.func @transform_7(%arg0: i32, %arg1: i32) -> (i32, i32) {
    %c0_i32 = arith.constant 0 : i32
    %c0_i32_0 = arith.constant 0 : i32
    %c0_i32_1 = arith.constant 0 : i32
    return %c0_i32, %c0_i32_0 : i32, i32
  }
  func.func @transform_8(%arg0: i32, %arg1: i32) -> (i32, i32) {
    %c0_i32 = arith.constant 0 : i32
    %c0_i32_0 = arith.constant 0 : i32
    %c0_i32_1 = arith.constant 0 : i32
    return %c0_i32, %c0_i32_0 : i32, i32
  }
  func.func @transform_9(%arg0: i32, %arg1: i32) -> (i32, i32) {
    %c0_i32 = arith.constant 0 : i32
    %c0_i32_0 = arith.constant 0 : i32
    %c0_i32_1 = arith.constant 0 : i32
    return %c0_i32, %c0_i32_0 : i32, i32
  }
  func.func @transform_10(%arg0: i32, %arg1: i32) -> (i32, i32, i32) {
    %c0_i32 = arith.constant 0 : i32
    %c0_i32_0 = arith.constant 0 : i32
    return %arg0, %c0_i32, %arg1 : i32, i32, i32
  }
}

</mosaic_0001>

<llo_original>
// kernel: tpu_custom_call.1
$region0: #{tpu_custom_call.1}
  #allocation0 [shape = 'u32[]', space=smem, size = 0x4, offset = 0x4, fixed_abs, tag = 'smem constant byte address 0x4 - core index']
  #allocation1 [shape = 'u32[144,128]{1,0:T(1,128)}', space=vmem, size = 0x12000, scoped, tag = 'internal scratch']
  %s0 = inlined_call_operand.vmem [shape: bf16[2,1,12,130], index: 0, kind: input, shape index: {}]
  %s1 = inlined_call_operand.vmem [shape: bf16[8,12], index: 1, kind: input, shape index: {}]
  %s2 = inlined_call_operand.vmem [shape: f32[8,1], index: 2, kind: input, shape index: {}]
  %s3 = inlined_call_operand.vmem [shape: f32[8,1], index: 3, kind: input, shape index: {}]
  %s4 = inlined_call_operand.vmem [shape: bf16[8,24], index: 4, kind: input, shape index: {}]
  %s5 = inlined_call_operand.vmem [shape: f32[8,1], index: 5, kind: input, shape index: {}]
  %s6 = inlined_call_operand.vmem [shape: f32[8,1], index: 6, kind: input, shape index: {}]
  %s7 = inlined_call_operand.vmem [shape: bf16[8,4], index: 7, kind: input, shape index: {}]
  %s8 = inlined_call_operand.vmem [shape: f32[8,1], index: 8, kind: input, shape index: {}]
  %s9 = inlined_call_operand.vmem [shape: f32[8,1], index: 9, kind: input, shape index: {}]
  %s10 = inlined_call_operand.hbm [shape: f32[2,8,128], index: 10, kind: output, shape index: {}]
  %s11 = sld [smem:[#allocation0]]
  $region73: #{tpu_custom_call.1} parent=0
    _
  %s13 = ssub.s32 1, %s11
  %s14 = scalar_select 0, %s13, %s11
  $region1: #{tpu_custom_call.1} parent=0
    #allocation2 [shape = 'u8[8192]{0}', space=vmem, size = 0x2000, scoped, tag = 'output window, operand 0']
    #allocation3 [shape = 's32[2]{0}', space=sflag, size = 0x8, scoped, tag = 'scoped memory for tpu_custom_call.1']
    %15 = vsyncpa [#allocation3], 0
    %s16 = scalar_lea.sflag [#allocation3], 1
    %17 = vsyncpa %s16, 0
    loop: start=0, step=1, limit=4
    $region2: #{tpu_custom_call.1} parent=1 // loop_pre_header
      _
    $region3: #{tpu_custom_call.1} parent=1 // loop_header
      %s19 = sphi 0, %s23
      %p20 = scmp.ge.s32.totalorder %s19, 4
      %s26 = sphi 0, %s38
      %s27 = sphi 0, %s34
      %s28 = sphi 0, %s26
      %s29 = sphi 0, %s27
      %s30 = sphi 0, %s28
      %s31 = sphi 0, %s29
      %s43 = sphi 0, %s45
      %s46 = sphi 0, %s43
      %s47 = sphi 0, %s46
      %s63 = sphi 0, %s47
      %s67 = sphi 0, %s67
      %s69 = sphi 0, %s67
      %s70 = sphi 0, %s69
      %s84 = sphi 0, %s70
      %s88 = sphi 0, %s88
      %s90 = sphi 0, %s88
      %s91 = sphi 0, %s90
      %s105 = sphi 0, %s91
      %s109 = sphi 0, %s109
      %s111 = sphi 0, %s109
      %s112 = sphi 0, %s111
      %s126 = sphi 0, %s112
      %s130 = sphi 0, %s130
      %s132 = sphi 0, %s130
      %s133 = sphi 0, %s132
      %s147 = sphi 0, %s133
      %s151 = sphi 0, %s151
      %s153 = sphi 0, %s151
      %s154 = sphi 0, %s153
      %s168 = sphi 0, %s154
      %s172 = sphi 0, %s172
      %s174 = sphi 0, %s172
      %s175 = sphi 0, %s174
      %s189 = sphi 0, %s175
      %s193 = sphi 0, %s193
      %s195 = sphi 0, %s193
      %s196 = sphi 0, %s195
      %s210 = sphi 0, %s196
      %s214 = sphi 0, %s214
      %s216 = sphi 0, %s214
      %s217 = sphi 0, %s216
      %s231 = sphi 0, %s217
      %s235 = sphi 0, %s235
      %s237 = sphi 0, %s235
      %s238 = sphi 0, %s237
      %s252 = sphi 0, %s238
      %s260 = sphi 0, %s262
      %s263 = sphi 0, %s260
      %s264 = sphi 0, %s263
      %s280 = sphi 0, %s264
    $region4: #{tpu_custom_call.1} parent=1 // loop_header_branch
      %22 = sbr.rel (%p20) target = $region8
    $region5: #{tpu_custom_call.1} parent=1 // loop_body
      %s24 = ssub.s32 %s19, 1
      %s25 = ssub.s32 %s19, 2
      %s32 = sadd.s32 1, %s27
      %p33 = scmp.ge.s32.totalorder %s32, 1
      %s34 = scalar_select %p33, 0, %s32
      %s35 = sadd.s32 1, %s26
      %s36 = scalar_select %p33, %s35, %s26
      %p37 = scmp.ge.s32.totalorder %s36, 2
      %s38 = scalar_select %p37, 0, %s36
      %s39 = ssub.s32 %s26, %s38
      %s40 = ssub.s32 %s27, %s34
      %s41 = sor.u32 %s39, %s40
      %p42 = scmp.eq.s32.totalorder %s41, 0
      %s44 = sadd.s32 %s43, 1
      %s45 = scalar_select %p42, %s43, %s44
      %p48 = pneg %p42
      %p49 = scmp.eq.s32.totalorder %s19, 1
      %p50 = por %p48, %p49
      %p51 = scmp.ne.s32.totalorder %s43, %s46
      %p52 = scmp.eq.s32.totalorder %s19, 0
      %p53 = por %p51, %p52
      %p54 = scmp.ne.s32.totalorder %s43, %s46
      %p55 = scmp.eq.s32.totalorder %s24, 1
      %p56 = por %p54, %p55
      %p57 = scmp.ne.s32.totalorder %s46, %s47
      %p58 = scmp.eq.s32.totalorder %s24, 0
      %p59 = por %p57, %p58
      %p60 = scmp.ne.s32.totalorder %s46, %s47
      %p61 = scmp.eq.s32.totalorder %s25, 1
      %p62 = por %p60, %p61
      %p64 = scmp.ne.s32.totalorder %s47, %s63
      %p65 = scmp.eq.s32.totalorder %s25, 0
      %p66 = por %p64, %p65
      %s68 = sadd.s32 %s67, 1
      %p71 = scmp.eq.s32.totalorder %s19, 1
      %p72 = scmp.ne.s32.totalorder %s67, %s69
      %p73 = scmp.eq.s32.totalorder %s19, 0
      %p74 = por %p72, %p73
      %p75 = scmp.ne.s32.totalorder %s67, %s69
      %p76 = scmp.eq.s32.totalorder %s24, 1
      %p77 = por %p75, %p76
      %p78 = scmp.ne.s32.totalorder %s69, %s70
      %p79 = scmp.eq.s32.totalorder %s24, 0
      %p80 = por %p78, %p79
      %p81 = scmp.ne.s32.totalorder %s69, %s70
      %p82 = scmp.eq.s32.totalorder %s25, 1
      %p83 = por %p81, %p82
      %p85 = scmp.ne.s32.totalorder %s70, %s84
      %p86 = scmp.eq.s32.totalorder %s25, 0
      %p87 = por %p85, %p86
      %s89 = sadd.s32 %s88, 1
      %p92 = scmp.eq.s32.totalorder %s19, 1
      %p93 = scmp.ne.s32.totalorder %s88, %s90
      %p94 = scmp.eq.s32.totalorder %s19, 0
      %p95 = por %p93, %p94
      %p96 = scmp.ne.s32.totalorder %s88, %s90
      %p97 = scmp.eq.s32.totalorder %s24, 1
      %p98 = por %p96, %p97
      %p99 = scmp.ne.s32.totalorder %s90, %s91
      %p100 = scmp.eq.s32.totalorder %s24, 0
      %p101 = por %p99, %p100
      %p102 = scmp.ne.s32.totalorder %s90, %s91
      %p103 = scmp.eq.s32.totalorder %s25, 1
      %p104 = por %p102, %p103
      %p106 = scmp.ne.s32.totalorder %s91, %s105
      %p107 = scmp.eq.s32.totalorder %s25, 0
      %p108 = por %p106, %p107
      %s110 = sadd.s32 %s109, 1
      %p113 = scmp.eq.s32.totalorder %s19, 1
      %p114 = scmp.ne.s32.totalorder %s109, %s111
      %p115 = scmp.eq.s32.totalorder %s19, 0
      %p116 = por %p114, %p115
      %p117 = scmp.ne.s32.totalorder %s109, %s111
      %p118 = scmp.eq.s32.totalorder %s24, 1
      %p119 = por %p117, %p118
      %p120 = scmp.ne.s32.totalorder %s111, %s112
      %p121 = scmp.eq.s32.totalorder %s24, 0
      %p122 = por %p120, %p121
      %p123 = scmp.ne.s32.totalorder %s111, %s112
      %p124 = scmp.eq.s32.totalorder %s25, 1
      %p125 = por %p123, %p124
      %p127 = scmp.ne.s32.totalorder %s112, %s126
      %p128 = scmp.eq.s32.totalorder %s25, 0
      %p129 = por %p127, %p128
      %s131 = sadd.s32 %s130, 1
      %p134 = scmp.eq.s32.totalorder %s19, 1
      %p135 = scmp.ne.s32.totalorder %s130, %s132
      %p136 = scmp.eq.s32.totalorder %s19, 0
      %p137 = por %p135, %p136
      %p138 = scmp.ne.s32.totalorder %s130, %s132
      %p139 = scmp.eq.s32.totalorder %s24, 1
      %p140 = por %p138, %p139
      %p141 = scmp.ne.s32.totalorder %s132, %s133
      %p142 = scmp.eq.s32.totalorder %s24, 0
      %p143 = por %p141, %p142
      %p144 = scmp.ne.s32.totalorder %s132, %s133
      %p145 = scmp.eq.s32.totalorder %s25, 1
      %p146 = por %p144, %p145
      %p148 = scmp.ne.s32.totalorder %s133, %s147
      %p149 = scmp.eq.s32.totalorder %s25, 0
      %p150 = por %p148, %p149
      %s152 = sadd.s32 %s151, 1
      %p155 = scmp.eq.s32.totalorder %s19, 1
      %p156 = scmp.ne.s32.totalorder %s151, %s153
      %p157 = scmp.eq.s32.totalorder %s19, 0
      %p158 = por %p156, %p157
      %p159 = scmp.ne.s32.totalorder %s151, %s153
      %p160 = scmp.eq.s32.totalorder %s24, 1
      %p161 = por %p159, %p160
      %p162 = scmp.ne.s32.totalorder %s153, %s154
      %p163 = scmp.eq.s32.totalorder %s24, 0
      %p164 = por %p162, %p163
      %p165 = scmp.ne.s32.totalorder %s153, %s154
      %p166 = scmp.eq.s32.totalorder %s25, 1
      %p167 = por %p165, %p166
      %p169 = scmp.ne.s32.totalorder %s154, %s168
      %p170 = scmp.eq.s32.totalorder %s25, 0
      %p171 = por %p169, %p170
      %s173 = sadd.s32 %s172, 1
      %p176 = scmp.eq.s32.totalorder %s19, 1
      %p177 = scmp.ne.s32.totalorder %s172, %s174
      %p178 = scmp.eq.s32.totalorder %s19, 0
      %p179 = por %p177, %p178
      %p180 = scmp.ne.s32.totalorder %s172, %s174
      %p181 = scmp.eq.s32.totalorder %s24, 1
      %p182 = por %p180, %p181
      %p183 = scmp.ne.s32.totalorder %s174, %s175
      %p184 = scmp.eq.s32.totalorder %s24, 0
      %p185 = por %p183, %p184
      %p186 = scmp.ne.s32.totalorder %s174, %s175
      %p187 = scmp.eq.s32.totalorder %s25, 1
      %p188 = por %p186, %p187
      %p190 = scmp.ne.s32.totalorder %s175, %s189
      %p191 = scmp.eq.s32.totalorder %s25, 0
      %p192 = por %p190, %p191
      %s194 = sadd.s32 %s193, 1
      %p197 = scmp.eq.s32.totalorder %s19, 1
      %p198 = scmp.ne.s32.totalorder %s193, %s195
      %p199 = scmp.eq.s32.totalorder %s19, 0
      %p200 = por %p198, %p199
      %p201 = scmp.ne.s32.totalorder %s193, %s195
      %p202 = scmp.eq.s32.totalorder %s24, 1
      %p203 = por %p201, %p202
      %p204 = scmp.ne.s32.totalorder %s195, %s196
      %p205 = scmp.eq.s32.totalorder %s24, 0
      %p206 = por %p204, %p205
      %p207 = scmp.ne.s32.totalorder %s195, %s196
      %p208 = scmp.eq.s32.totalorder %s25, 1
      %p209 = por %p207, %p208
      %p211 = scmp.ne.s32.totalorder %s196, %s210
      %p212 = scmp.eq.s32.totalorder %s25, 0
      %p213 = por %p211, %p212
      %s215 = sadd.s32 %s214, 1
      %p218 = scmp.eq.s32.totalorder %s19, 1
      %p219 = scmp.ne.s32.totalorder %s214, %s216
      %p220 = scmp.eq.s32.totalorder %s19, 0
      %p221 = por %p219, %p220
      %p222 = scmp.ne.s32.totalorder %s214, %s216
      %p223 = scmp.eq.s32.totalorder %s24, 1
      %p224 = por %p222, %p223
      %p225 = scmp.ne.s32.totalorder %s216, %s217
      %p226 = scmp.eq.s32.totalorder %s24, 0
      %p227 = por %p225, %p226
      %p228 = scmp.ne.s32.totalorder %s216, %s217
      %p229 = scmp.eq.s32.totalorder %s25, 1
      %p230 = por %p228, %p229
      %p232 = scmp.ne.s32.totalorder %s217, %s231
      %p233 = scmp.eq.s32.totalorder %s25, 0
      %p234 = por %p232, %p233
      %s236 = sadd.s32 %s235, 1
      %p239 = scmp.eq.s32.totalorder %s19, 1
      %p240 = scmp.ne.s32.totalorder %s235, %s237
      %p241 = scmp.eq.s32.totalorder %s19, 0
      %p242 = por %p240, %p241
      %p243 = scmp.ne.s32.totalorder %s235, %s237
      %p244 = scmp.eq.s32.totalorder %s24, 1
      %p245 = por %p243, %p244
      %p246 = scmp.ne.s32.totalorder %s237, %s238
      %p247 = scmp.eq.s32.totalorder %s24, 0
      %p248 = por %p246, %p247
      %p249 = scmp.ne.s32.totalorder %s237, %s238
      %p250 = scmp.eq.s32.totalorder %s25, 1
      %p251 = por %p249, %p250
      %p253 = scmp.ne.s32.totalorder %s238, %s252
      %p254 = scmp.eq.s32.totalorder %s25, 0
      %p255 = por %p253, %p254
      %s256 = ssub.s32 %s26, %s38
      %s257 = ssub.s32 %s27, %s34
      %s258 = sor.u32 %s256, %s257
      %p259 = scmp.eq.s32.totalorder %s258, 0
      %s261 = sadd.s32 %s260, 1
      %s262 = scalar_select %p259, %s260, %s261
      %p265 = pneg %p259
      %p266 = scmp.eq.s32.totalorder %s19, 1
      %p267 = por %p265, %p266
      %p268 = scmp.ne.s32.totalorder %s260, %s263
      %p269 = scmp.eq.s32.totalorder %s19, 0
      %p270 = por %p268, %p269
      %p271 = scmp.ne.s32.totalorder %s260, %s263
      %p272 = scmp.eq.s32.totalorder %s24, 1
      %p273 = por %p271, %p272
      %p274 = scmp.ne.s32.totalorder %s263, %s264
      %p275 = scmp.eq.s32.totalorder %s24, 0
      %p276 = por %p274, %p275
      %p277 = scmp.ne.s32.totalorder %s263, %s264
      %p278 = scmp.eq.s32.totalorder %s25, 1
      %p279 = por %p277, %p278
      %p281 = scmp.ne.s32.totalorder %s264, %s280
      %p282 = scmp.eq.s32.totalorder %s25, 0
      %p283 = por %p281, %p282
      %p284 = scmp.le.s32.totalorder 1, %s19
      %p285 = scmp.lt.s32.totalorder %s19, 3
      %p286 = pnand %p284, %p285
      %p287 = pneg %p286
      // Predicated region
      $region9: #{tpu_custom_call.1} parent=5 // pred_check
        _
      $region10: #{tpu_custom_call.1} parent=5 // pred_check_branch
        %289 = sbr.rel (%p286) target = $region12
      $region11: #{tpu_custom_call.1} parent=5 // pred_region
        %s290 = ssub.s32 %s19, 1
        // Predicated region
        $region13: #{tpu_custom_call.1} parent=11 // pred_check
          %p291 = pneg %p80
        $region14: #{tpu_custom_call.1} parent=11 // pred_check_branch
          %293 = sbr.rel (%p291) target = $region16
        $region15: #{tpu_custom_call.1} parent=11 // pred_region
          _
        $region16: #{tpu_custom_call.1} parent=11 // pred_fallthru
          _
        // Predicated region
        $region17: #{tpu_custom_call.1} parent=11 // pred_check
          %p294 = pneg %p101
        $region18: #{tpu_custom_call.1} parent=11 // pred_check_branch
          %296 = sbr.rel (%p294) target = $region20
        $region19: #{tpu_custom_call.1} parent=11 // pred_region
          _
        $region20: #{tpu_custom_call.1} parent=11 // pred_fallthru
          _
        // Predicated region
        $region21: #{tpu_custom_call.1} parent=11 // pred_check
          %p297 = pneg %p122
        $region22: #{tpu_custom_call.1} parent=11 // pred_check_branch
          %299 = sbr.rel (%p297) target = $region24
        $region23: #{tpu_custom_call.1} parent=11 // pred_region
          _
        $region24: #{tpu_custom_call.1} parent=11 // pred_fallthru
          _
        // Predicated region
        $region25: #{tpu_custom_call.1} parent=11 // pred_check
          %p300 = pneg %p143
        $region26: #{tpu_custom_call.1} parent=11 // pred_check_branch
          %302 = sbr.rel (%p300) target = $region28
        $region27: #{tpu_custom_call.1} parent=11 // pred_region
          _
        $region28: #{tpu_custom_call.1} parent=11 // pred_fallthru
          _
        // Predicated region
        $region29: #{tpu_custom_call.1} parent=11 // pred_check
          %p303 = pneg %p164
        $region30: #{tpu_custom_call.1} parent=11 // pred_check_branch
          %305 = sbr.rel (%p303) target = $region32
        $region31: #{tpu_custom_call.1} parent=11 // pred_region
          _
        $region32: #{tpu_custom_call.1} parent=11 // pred_fallthru
          _
        // Predicated region
        $region33: #{tpu_custom_call.1} parent=11 // pred_check
          %p306 = pneg %p185
        $region34: #{tpu_custom_call.1} parent=11 // pred_check_branch
          %308 = sbr.rel (%p306) target = $region36
        $region35: #{tpu_custom_call.1} parent=11 // pred_region
          _
        $region36: #{tpu_custom_call.1} parent=11 // pred_fallthru
          _
        // Predicated region
        $region37: #{tpu_custom_call.1} parent=11 // pred_check
          %p309 = pneg %p206
        $region38: #{tpu_custom_call.1} parent=11 // pred_check_branch
          %311 = sbr.rel (%p309) target = $region40
        $region39: #{tpu_custom_call.1} parent=11 // pred_region
          _
        $region40: #{tpu_custom_call.1} parent=11 // pred_fallthru
          _
        // Predicated region
        $region41: #{tpu_custom_call.1} parent=11 // pred_check
          %p312 = pneg %p227
        $region42: #{tpu_custom_call.1} parent=11 // pred_check_branch
          %314 = sbr.rel (%p312) target = $region44
        $region43: #{tpu_custom_call.1} parent=11 // pred_region
          _
        $region44: #{tpu_custom_call.1} parent=11 // pred_fallthru
          _
        // Predicated region
        $region45: #{tpu_custom_call.1} parent=11 // pred_check
          %p315 = pneg %p248
        $region46: #{tpu_custom_call.1} parent=11 // pred_check_branch
          %317 = sbr.rel (%p315) target = $region48
        $region47: #{tpu_custom_call.1} parent=11 // pred_region
          _
        $region48: #{tpu_custom_call.1} parent=11 // pred_fallthru
          _
      $region12: #{tpu_custom_call.1} parent=5 // pred_fallthru
        _
      %p318 = scmp.lt.s32.totalorder %s19, 2
      // Predicated region
      $region49: #{tpu_custom_call.1} parent=5 // pred_check
        %p319 = pneg %p318
      $region50: #{tpu_custom_call.1} parent=5 // pred_check_branch
        %321 = sbr.rel (%p319) target = $region52
      $region51: #{tpu_custom_call.1} parent=5 // pred_region
        // Predicated region
        $region53: #{tpu_custom_call.1} parent=51 // pred_check
          %p322 = pneg %p53
        $region54: #{tpu_custom_call.1} parent=51 // pred_check_branch
          %324 = sbr.rel (%p322) target = $region56
        $region55: #{tpu_custom_call.1} parent=51 // pred_region
          %p325 = scmp.lt.s32.totalorder %s26, 1
          %s326 = scalar_select %p325, %s26, 1
          %p327 = scmp.lt.s32.totalorder %s27, 0
          %s328 = scalar_select %p327, %s27, 0
          %s329 = smul.addr %s328, 4
          %s330 = smul.addr %s326, 4
          %s331 = sadd.s32 %s329, %s330
          %s332 = smul.addr %s331, 4
          %s333 = scalar_lea.vmem %s0, %s332
        $region56: #{tpu_custom_call.1} parent=51 // pred_fallthru
          _
      $region52: #{tpu_custom_call.1} parent=5 // pred_fallthru
        _
      %p334 = scmp.le.s32.totalorder 1, %s19
      %p335 = scmp.lt.s32.totalorder %s19, 3
      %p336 = pnand %p334, %p335
      %p337 = pneg %p336
      // Predicated region
      $region57: #{tpu_custom_call.1} parent=5 // pred_check
        _
      $region58: #{tpu_custom_call.1} parent=5 // pred_check_branch
        %339 = sbr.rel (%p336) target = $region60
      $region59: #{tpu_custom_call.1} parent=5 // pred_region
        %s340 = ssub.s32 %s19, 1
        %p341 = scmp.lt.s32.totalorder %s28, 1
        %s342 = scalar_select %p341, %s28, 1
        %p343 = scmp.lt.s32.totalorder %s29, 0
        %s344 = scalar_select %p343, %s29, 0
        %s345 = smul.addr %s344, 4
        %s346 = smul.addr %s342, 4
        %s347 = sadd.s32 %s345, %s346
        %s348 = smul.addr %s347, 4
        %s349 = scalar_lea.vmem %s0, %s348
        %p350 = pneg %p59
        %p351 = pneg %p56
        %p352 = pneg %p80
        %p353 = pneg %p77
        %p354 = pneg %p101
        %p355 = pneg %p98
        %p356 = pneg %p122
        %p357 = pneg %p119
        %p358 = pneg %p143
        %p359 = pneg %p140
        %p360 = pneg %p164
        %p361 = pneg %p161
        %p362 = pneg %p185
        %p363 = pneg %p182
        %p364 = pneg %p206
        %p365 = pneg %p203
        %p366 = pneg %p227
        %p367 = pneg %p224
        %p368 = pneg %p248
        %p369 = pneg %p245
        %p370 = pneg %p276
        %p371 = pneg %p273
        %s372 = sand.u32 %s263, 1
        %s373 = scalar_lea.sflag [#allocation3], %s372
        %s374 = sand.u32 %s263, 1
        %s375 = smul.addr %s374, 8
        %s376 = scalar_lea.vmem [#allocation2], %s375
        %p377 = scmp.lt.s32.totalorder %s28, 1
        %s378 = scalar_select %p377, %s28, 1
        %p379 = scmp.lt.s32.totalorder %s29, 0
        %s380 = scalar_select %p379, %s29, 0
        %s381 = smul.addr %s380, 4
        %s382 = smul.addr %s378, 4
        %s383 = sadd.s32 %s381, %s382
        %s384 = smul.addr %s383, 4
        %s385 = scalar_lea.vmem %s0, %s384
        %v387 = vld [vmem:[%s385] sm:$0xff]
        %v388 = vld [vmem:[%s385 + $0x8] sm:$0x33]
        %v389 = vld [vmem:[%s1] sm:$0xf]
        %v392 = vunpack.c.l.b16 %v387
        %v393 = vunpack.c.h.b16 %v387
        %v394 = vunpack.c.l.b16 %v388
        %v395 = vunpack.c.h.b16 %v388
        %v396 = vpack.c.b16 %v394, %v392
        %v397 = vpack.c.b16 %v395, %v393
        %vm398 = vcmask 97280
        %v400 = vsel %vm398, %v389, 0
        %vm402 = vcmask 1045504
        %v404 = vsel %vm402, %v396, 0
        %v407 = vsel %vm402, %v397, 0
        %409 = vmatprep.subr.bf16.mxu0 %v407
        %410 = vmatpush1.bf16.msra.mxu0 %v404
        %411 = vmatprep.subr.bf16.mxu0 0
        %412 = vmatpush1.bf16.msra.mxu0 0
        %413 = vmatprep.subr.bf16.mxu0 0
        %414 = vmatpush1.bf16.msra.mxu0 0
        %415 = vmatprep.subr.bf16.mxu0 0
        %416 = vmatpush1.bf16.msra.mxu0 0
        %417 = vmatprep.subr.bf16.mxu0 0
        %418 = vmatpush1.bf16.msra.mxu0 0
        %419 = vmatprep.subr.bf16.mxu0 0
        %420 = vmatpush1.bf16.msra.mxu0 0
        %421 = vmatprep.subr.bf16.mxu0 0
        %422 = vmatpush1.bf16.msra.mxu0 0
        %423 = vmatprep.subr.bf16.mxu0 0
        %424 = vmatpush1.bf16.msra.mxu0 0
        %425 = vmatprep.subr.bf16.mxu0 0
        %426 = vmatpush1.bf16.msra.mxu0 0
        %427 = vmatprep.subr.bf16.mxu0 0
        %428 = vmatpush1.bf16.msra.mxu0 0
        %429 = vmatprep.subr.bf16.mxu0 0
        %430 = vmatpush1.bf16.msra.mxu0 0
        %431 = vmatprep.subr.bf16.mxu0 0
        %432 = vmatpush1.bf16.msra.mxu0 0
        %433 = vmatprep.subr.bf16.mxu0 0
        %434 = vmatpush1.bf16.msra.mxu0 0
        %435 = vmatprep.subr.bf16.mxu0 0
        %436 = vmatpush1.bf16.msra.mxu0 0
        %437 = vmatprep.subr.bf16.mxu0 0
        %438 = vmatpush1.bf16.msra.mxu0 0
        %439 = vmatprep.subr.bf16.mxu0 0
        %440 = vmatpush1.bf16.msra.mxu0 0
        %441 = vmatprep.mubr.bf16.mxu0 0
        %442 = vmatmul.mubr.bf16.gmra.mrb[0].mxu0 %v400
        %v443 = vpop.f32.mrb[0].mxu0
        %v444 = vadd.f32 0.0, %v443
        %v445 = vpop.f32.mrb[0].mxu0
        %v446 = vadd.f32 0.0, %v445
        %v447 = vpop.f32.mrb[0].mxu0
        %v448 = vpop.f32.mrb[0].mxu0
        %449 = vdwg.mxu0
        %v450 = vld [vmem:[%s2] sm:$0xff]
        %452 = vset.pattern.permute.xlu0 0
        %453 = vperm.xlu0 %452, %v450
        %v454 = vpop.permute.xlu0 %453
        %v456 = vmul.f32 %v444, %v454
        %v457 = vmul.f32 %v446, %v454
        %v458 = vld [vmem:[%s3] sm:$0xff]
        %460 = vset.pattern.permute.xlu0 0
        %461 = vperm.xlu0 %460, %v458
        %v462 = vpop.permute.xlu0 %461
        %v464 = vadd.f32 %v456, %v462
        %v465 = vadd.f32 %v457, %v462
        %v466 = vmax.f32 %v464, 0.0
        %v467 = vmax.f32 %v465, 0.0
        %s468 = smul.u32 %s29, 128
        %s469 = ssub.s32 %s468, 1
        %v470 = vlaneseq
        %v471 = vand.u32 %v470, 127
        %v472 = vadd.s32 %v471, 128
        %v473 = vstv %s469
        %v474 = vadd.s32 %v473, %v471
        %v475 = vadd.s32 %v473, %v472
        %vm476 = vcmp.ge.s32.totalorder %v474, 0
        %vm477 = vcmp.ge.s32.totalorder %v475, 0
        %vm478 = vcmp.lt.s32.totalorder %v474, 8
        %vm479 = vcmp.lt.s32.totalorder %v475, 8
        %vm480 = vmand %vm476, %vm478
        %vm481 = vmand %vm477, %vm479
        %v482 = vsel %vm480, 1, 0
        %v483 = vsel %vm481, 1, 0
        %vm484 = vcmp.eq.s32.totalorder %v482, 1
        %vm485 = vcmp.eq.s32.totalorder %v483, 1
        %v486 = vsel %vm484, %v466, 0.0
        %v487 = vsel %vm485, %v467, 0.0
        %v488 = vpack.c.bf16 %v486, %v486
        %v489 = vpack.c.bf16 %v487, %v487
        %v492 = vrot.slane %v488, 4
        %v493 = vrot.slane %v489, 4
        %494 = vrot.lane.b32.xlu0 %v492, 127
        %v495 = vpop.permute.xlu0 %494
        %496 = vrot.lane.b32.xlu0 %v493, 127
        %v497 = vpop.permute.xlu0 %496
        %vm498 = vcmask 1039360
        %v499 = vsel %vm498, %v495, %v497
        %500 = vrot.lane.b32.xlu0 %v488, 126
        %v501 = vpop.permute.xlu0 %500
        %502 = vrot.lane.b32.xlu0 %v489, 126
        %v503 = vpop.permute.xlu0 %502
        %vm504 = vcmask 1031168
        %v505 = vsel %vm504, %v501, %v503
        %vm506 = vcmask 1043456
        %v509 = vsel %vm506, %v488, %v499
        %v511 = vld [vmem:[%s4] sm:$0xf]
        %vm512 = vcmask 195584
        %v514 = vsel %vm512, %v511, 0
        %v517 = vsel %vm506, %v505, 0
        %519 = vmatprep.subr.bf16.mxu0 0
        %520 = vmatpush1.bf16.msra.mxu0 %v509
        %521 = vmatprep.subr.bf16.mxu0 0
        %522 = vmatpush1.bf16.msra.mxu0 %v517
        %523 = vmatprep.subr.bf16.mxu0 0
        %524 = vmatpush1.bf16.msra.mxu0 0
        %525 = vmatprep.subr.bf16.mxu0 0
        %526 = vmatpush1.bf16.msra.mxu0 0
        %527 = vmatprep.subr.bf16.mxu0 0
        %528 = vmatpush1.bf16.msra.mxu0 0
        %529 = vmatprep.subr.bf16.mxu0 0
        %530 = vmatpush1.bf16.msra.mxu0 0
        %531 = vmatprep.subr.bf16.mxu0 0
        %532 = vmatpush1.bf16.msra.mxu0 0
        %533 = vmatprep.subr.bf16.mxu0 0
        %534 = vmatpush1.bf16.msra.mxu0 0
        %535 = vmatprep.subr.bf16.mxu0 0
        %536 = vmatpush1.bf16.msra.mxu0 0
        %537 = vmatprep.subr.bf16.mxu0 0
        %538 = vmatpush1.bf16.msra.mxu0 0
        %539 = vmatprep.subr.bf16.mxu0 0
        %540 = vmatpush1.bf16.msra.mxu0 0
        %541 = vmatprep.subr.bf16.mxu0 0
        %542 = vmatpush1.bf16.msra.mxu0 0
        %543 = vmatprep.subr.bf16.mxu0 0
        %544 = vmatpush1.bf16.msra.mxu0 0
        %545 = vmatprep.subr.bf16.mxu0 0
        %546 = vmatpush1.bf16.msra.mxu0 0
        %547 = vmatprep.subr.bf16.mxu0 0
        %548 = vmatpush1.bf16.msra.mxu0 0
        %549 = vmatprep.subr.bf16.mxu0 0
        %550 = vmatpush1.bf16.msra.mxu0 0
        %551 = vmatprep.mubr.bf16.mxu0 0
        %552 = vmatmul.mubr.bf16.gmra.mrb[0].mxu0 %v514
        %v553 = vpop.f32.mrb[0].mxu0
        %v554 = vadd.f32 0.0, %v553
        %v555 = vpop.f32.mrb[0].mxu0
        %v556 = vpop.f32.mrb[0].mxu0
        %v557 = vpop.f32.mrb[0].mxu0
        %558 = vdwg.mxu0
        %v559 = vld [vmem:[%s5] sm:$0xff]
        %561 = vset.pattern.permute.xlu0 0
        %562 = vperm.xlu0 %561, %v559
        %v563 = vpop.permute.xlu0 %562
        %v565 = vmul.f32 %v554, %v563
        %v566 = vld [vmem:[%s6] sm:$0xff]
        %568 = vset.pattern.permute.xlu0 0
        %569 = vperm.xlu0 %568, %v566
        %v570 = vpop.permute.xlu0 %569
        %v572 = vadd.f32 %v565, %v570
        %v573 = vmax.f32 %v572, 0.0
        %v574 = vld [vmem:[%s7] sm:$0xf]
        %v575 = vpack.c.b16 %v392, %v392
        %v576 = vpack.c.b16 %v393, %v393
        %v577 = vrot.slane %v575, 2
        %v578 = vrot.slane %v576, 2
        %579 = vrot.lane.b32.xlu0 %v577, 127
        %v580 = vpop.permute.xlu0 %579
        %581 = vrot.lane.b32.xlu0 %v578, 127
        %v582 = vpop.permute.xlu0 %581
        %v583 = vsel %vm498, %v580, %v582
        %vm584 = vcmask 31744
        %v586 = vsel %vm584, %v574, 0
        %vm588 = vcmask 1041408
        %v590 = vsel %vm588, %v583, 0
        %592 = vmatprep.subr.bf16.mxu0 0
        %593 = vmatpush1.bf16.msra.mxu0 %v590
        %594 = vmatprep.subr.bf16.mxu0 0
        %595 = vmatpush1.bf16.msra.mxu0 0
        %596 = vmatprep.subr.bf16.mxu0 0
        %597 = vmatpush1.bf16.msra.mxu0 0
        %598 = vmatprep.subr.bf16.mxu0 0
        %599 = vmatpush1.bf16.msra.mxu0 0
        %600 = vmatprep.subr.bf16.mxu0 0
        %601 = vmatpush1.bf16.msra.mxu0 0
        %602 = vmatprep.subr.bf16.mxu0 0
        %603 = vmatpush1.bf16.msra.mxu0 0
        %604 = vmatprep.subr.bf16.mxu0 0
        %605 = vmatpush1.bf16.msra.mxu0 0
        %606 = vmatprep.subr.bf16.mxu0 0
        %607 = vmatpush1.bf16.msra.mxu0 0
        %608 = vmatprep.subr.bf16.mxu0 0
        %609 = vmatpush1.bf16.msra.mxu0 0
        %610 = vmatprep.subr.bf16.mxu0 0
        %611 = vmatpush1.bf16.msra.mxu0 0
        %612 = vmatprep.subr.bf16.mxu0 0
        %613 = vmatpush1.bf16.msra.mxu0 0
        %614 = vmatprep.subr.bf16.mxu0 0
        %615 = vmatpush1.bf16.msra.mxu0 0
        %616 = vmatprep.subr.bf16.mxu0 0
        %617 = vmatpush1.bf16.msra.mxu0 0
        %618 = vmatprep.subr.bf16.mxu0 0
        %619 = vmatpush1.bf16.msra.mxu0 0
        %620 = vmatprep.subr.bf16.mxu0 0
        %621 = vmatpush1.bf16.msra.mxu0 0
        %622 = vmatprep.subr.bf16.mxu0 0
        %623 = vmatpush1.bf16.msra.mxu0 0
        %624 = vmatprep.mubr.bf16.mxu0 0
        %625 = vmatmul.mubr.bf16.gmra.mrb[0].mxu0 %v586
        %v626 = vpop.f32.mrb[0].mxu0
        %v627 = vadd.f32 0.0, %v626
        %v628 = vpop.f32.mrb[0].mxu0
        %v629 = vpop.f32.mrb[0].mxu0
        %v630 = vpop.f32.mrb[0].mxu0
        %631 = vdwg.mxu0
        %v632 = vld [vmem:[%s8] sm:$0xff]
        %634 = vset.pattern.permute.xlu0 0
        %635 = vperm.xlu0 %634, %v632
        %v636 = vpop.permute.xlu0 %635
        %v638 = vmul.f32 %v627, %v636
        %v639 = vld [vmem:[%s9] sm:$0xff]
        %641 = vset.pattern.permute.xlu0 0
        %642 = vperm.xlu0 %641, %v639
        %v643 = vpop.permute.xlu0 %642
        %v645 = vadd.f32 %v638, %v643
        %v646 = vadd.f32 %v573, %v645
        %v647 = vmax.f32 %v646, 0.0
        %648 = vst [vmem:[%s376] sm:$0xff] %v647
        %s649 = sand.u32 %s263, 1
        %s650 = scalar_lea.sflag [#allocation3], %s649
        %s651 = sand.u32 %s263, 1
        %s652 = smul.addr %s651, 8
        %s653 = scalar_lea.vmem [#allocation2], %s652
        // Predicated region
        $region61: #{tpu_custom_call.1} parent=59 // pred_check
          %p654 = pneg %p273
        $region62: #{tpu_custom_call.1} parent=59 // pred_check_branch
          %656 = sbr.rel (%p654) target = $region64
        $region63: #{tpu_custom_call.1} parent=59 // pred_region
          %s658 = ssub.s32 128, 128
          %659 = vsyncadd %s650, %s658
          %s660 = sadd.s32 %s29, %s28
          %s661 = smul.addr %s660, 128
          %s662 = scalar_lea.hbm %s10, %s661
          %s664 = sshll.u32 %s653, 4
          %s665 = int_to_ptr.vmem [resolvable:$true] %s664
          %667 = dma.vmem_to_hbm [thread:$0]  %s665, 128, %s662, %s650
        $region64: #{tpu_custom_call.1} parent=59 // pred_fallthru
          _
      $region60: #{tpu_custom_call.1} parent=5 // pred_fallthru
        _
      %p668 = scmp.le.s32.totalorder 2, %s19
      // Predicated region
      $region65: #{tpu_custom_call.1} parent=5 // pred_check
        %p669 = pneg %p668
      $region66: #{tpu_custom_call.1} parent=5 // pred_check_branch
        %671 = sbr.rel (%p669) target = $region68
      $region67: #{tpu_custom_call.1} parent=5 // pred_region
        %s672 = ssub.s32 %s19, 2
        // Predicated region
        $region69: #{tpu_custom_call.1} parent=67 // pred_check
          %p673 = pneg %p279
        $region70: #{tpu_custom_call.1} parent=67 // pred_check_branch
          %675 = sbr.rel (%p673) target = $region72
        $region71: #{tpu_custom_call.1} parent=67 // pred_region
          %s676 = sand.u32 %s264, 1
          %s677 = scalar_lea.sflag [#allocation3], %s676
          %s678 = sand.u32 %s264, 1
          %s679 = smul.addr %s678, 8
          %s680 = scalar_lea.vmem [#allocation2], %s679
          %681 = dma.done %s677, 128
        $region72: #{tpu_custom_call.1} parent=67 // pred_fallthru
          _
      $region68: #{tpu_custom_call.1} parent=5 // pred_fallthru
        _
    $region6: #{tpu_custom_call.1} parent=1 // loop_footer
      %s23 = sadd.s32 1, %s19
    $region7: #{tpu_custom_call.1} parent=1 // loop_footer_branch
      %18 = sbr.rel target = $region3
    $region8: #{tpu_custom_call.1} parent=1 // loop_exit
      _
    %682 = vsyncpa [#allocation3], 1
    %s683 = scalar_lea.sflag [#allocation3], 1
    %684 = vsyncpa %s683, 1

</llo_original>
